<compile_context>
chip_gen: v7x
topology: tpu7x:2x2x1
jax: 0.10.0
libtpu: 0.0.40
codegen_flags: <defaults>
</compile_context>

<pallas_src>
import functools

import jax
import jax.numpy as jnp
from jax.experimental import pallas as pl
from jax.experimental.pallas import tpu as pltpu


def _round_up(n, m):
    return ((n + m - 1) // m) * m


def worker_network_kernel(x_ref,
                          w1_ref, b1_ref,
                          w2_ref, b2_ref,
                          wh_t_ref, bh_t_ref,
                          out_ref, *, action_size):
    """One batch tile:
         h1 = relu(x @ W1 + b1)                    [TB, H]
         h2 = relu(h1 @ W2 + b2)                   [TB, H]
         y  = Wh_T contract_H h2  (+ bh_T)         [P8, TB]  (lane dim = batch)
       rows [0, A)   -> mean = y
       rows [A, 2A)  -> std  = softplus(y) + 1e-5
       rows [2A, P8) -> padding (sliced off in the wrapper)
    """
    x = x_ref[...]

    h1 = jnp.dot(x, w1_ref[...], preferred_element_type=jnp.float32) + b1_ref[...]
    h1 = jnp.maximum(h1, 0.0)

    h2 = jnp.dot(h1, w2_ref[...], preferred_element_type=jnp.float32) + b2_ref[...]
    h2 = jnp.maximum(h2, 0.0)

    # Fused transposed head: contract on H -> [P8, TB].
    y = jax.lax.dot_general(
        wh_t_ref[...], h2,
        dimension_numbers=(((1,), (1,)), ((), ())),
        preferred_element_type=jnp.float32) + bh_t_ref[...]

    # Numerically-stable softplus over only P8 (=8) rows; exp(-|y|) once.
    e = jnp.exp(-jnp.abs(y))
    sp = jnp.maximum(y, 0.0) + jnp.log1p(e) + 1e-5

    row = jax.lax.broadcasted_iota(jnp.int32, y.shape, dimension=0)
    out_ref[...] = jnp.where(row < action_size, y, sp).astype(out_ref.dtype)


def prepare_params(params):
    """One-time head fusion (hoisted out of the per-step hot path).

    Builds the transposed fused head weight [P8, H] and bias [P8, 1], where
    rows 0..A-1 hold the mean head, rows A..2A-1 hold the std head and the
    remaining rows (up to a multiple of 8 sublanes) are zero.
    """
    H, A = params["wm"].shape
    P8 = max(8, _round_up(2 * A, 8))
    wh_t = jnp.concatenate([params["wm"].T, params["ws"].T], axis=0)   # [2A, H]
    bh_t = jnp.concatenate([params["bm"].T, params["bs"].T], axis=0)   # [2A, 1]
    pad = P8 - 2 * A
    if pad:
        wh_t = jnp.pad(wh_t, ((0, pad), (0, 0)))
        bh_t = jnp.pad(bh_t, ((0, pad), (0, 0)))
    return dict(w1=params["w1"], b1=params["b1"],
                w2=params["w2"], b2=params["b2"],
                wh_t=wh_t, bh_t=bh_t,
                action_size=A, head_rows=P8)


def _choose_tiles(B, block_b):
    """Balanced batch tiling: (TB, Bp, n_blocks).

    For B < 256 use a single full block (always shape-legal).  Otherwise use
    an even number of blocks >= 2 (so both v7x TensorCores get work along the
    'parallel' grid axis) and a lane-dense tile (multiple of 128 batch rows
    in the output lane dimension), spreading the ragged tail across blocks.
    """
    if B < 256:
        return B, B, 1
    n_blocks = max(2, pl.cdiv(B, block_b))
    if n_blocks % 2:
        n_blocks += 1
    TB = _round_up(pl.cdiv(B, n_blocks), 128)
    Bp = TB * n_blocks
    return TB, Bp, n_blocks


def worker_network_forward(x, prep, *, block_b=2048):
    """x: [B, state_size] float32.  prep: output of prepare_params().

    Returns (mean, std), each [B, action_size] float32.
    """
    B, S = x.shape
    H = prep["w1"].shape[1]
    A = prep["action_size"]
    P8 = prep["head_rows"]

    TB, Bp, n_blocks = _choose_tiles(B, block_b)
    x_p = jnp.pad(x, ((0, Bp - B), (0, 0))) if Bp != B else x

    kernel = functools.partial(worker_network_kernel, action_size=A)

    cost = pl.CostEstimate(
        flops=2 * Bp * (S * H + H * H + H * P8),
        transcendentals=2 * Bp * P8,                      # exp + log1p per element
        bytes_accessed=4 * (Bp * S + S * H + H + H * H + H
                            + P8 * H + P8 + P8 * Bp),
    )

    out_t = pl.pallas_call(
        kernel,
        out_shape=jax.ShapeDtypeStruct((P8, Bp), jnp.float32),
        grid=(n_blocks,),
        in_specs=[
            pl.BlockSpec((TB, S), lambda i: (i, 0)),    # x: batch-tiled
            pl.BlockSpec((S, H), lambda i: (0, 0)),     # w1: VMEM-resident
            pl.BlockSpec((1, H), lambda i: (0, 0)),     # b1
            pl.BlockSpec((H, H), lambda i: (0, 0)),     # w2
            pl.BlockSpec((1, H), lambda i: (0, 0)),     # b2
            pl.BlockSpec((P8, H), lambda i: (0, 0)),    # fused transposed head W
            pl.BlockSpec((P8, 1), lambda i: (0, 0)),    # fused transposed head b
        ],
        out_specs=pl.BlockSpec((P8, TB), lambda i: (0, i)),
        compiler_params=pltpu.CompilerParams(
            dimension_semantics=("parallel",)),
        cost_estimate=cost,
    )(x_p, prep["w1"], prep["b1"], prep["w2"], prep["b2"],
      prep["wh_t"], prep["bh_t"])

    mean = out_t[:A, :B].T
    std = out_t[A:2 * A, :B].T
    return mean, std


def init_params(key, state_size, action_size, hidden_size=128):
    """nn.Linear-style init (U(-1/sqrt(fan_in), 1/sqrt(fan_in))); weights are
    stored pre-transposed: [in_features, out_features]."""
    def linear(key, fan_in, fan_out):
        kw, kb = jax.random.split(key)
        bound = 1.0 / jnp.sqrt(fan_in)
        w = jax.random.uniform(kw, (fan_in, fan_out), jnp.float32, -bound, bound)
        b = jax.random.uniform(kb, (1, fan_out), jnp.float32, -bound, bound)
        return w, b

    k1, k2, k3, k4 = jax.random.split(key, 4)
    w1, b1 = linear(k1, state_size, hidden_size)
    w2, b2 = linear(k2, hidden_size, hidden_size)
    wm, bm = linear(k3, hidden_size, action_size)
    ws, bs = linear(k4, hidden_size, action_size)
    return dict(w1=w1, b1=b1, w2=w2, b2=b2, wm=wm, bm=bm, ws=ws, bs=bs)


def reference_forward(x, params):
    h1 = jax.nn.relu(x @ params["w1"] + params["b1"])
    h2 = jax.nn.relu(h1 @ params["w2"] + params["b2"])
    mean = h2 @ params["wm"] + params["bm"]
    std = jax.nn.softplus(h2 @ params["ws"] + params["bs"]) + 1e-5
    return mean, std


if __name__ == "__main__":
    key = jax.random.PRNGKey(0)
    kx, kx2, kp = jax.random.split(key, 3)

    state_size = 8
    action_size = 2
    hidden_size = 128
    raw_params = init_params(kp, state_size, action_size, hidden_size)
    prep = prepare_params(raw_params)      # head fusion done once, not per call

    # Small single-block case (typical env-step batch).
    x_small = jax.random.normal(kx, (4, state_size), jnp.float32)
    mean_s, std_s = worker_network_forward(x_small, prep)
    jax.block_until_ready((mean_s, std_s))
    mean_ref_s, std_ref_s = reference_forward(x_small, raw_params)
    assert mean_s.shape == (4, action_size) and std_s.shape == (4, action_size)
    assert jnp.allclose(mean_s, mean_ref_s, atol=1e-4, rtol=1e-4)
    assert jnp.allclose(std_s, std_ref_s, atol=1e-4, rtol=1e-4)
    assert bool(jnp.all(std_s > 0.0))

    # Larger batch exercising the balanced, even-block pipelined grid.
    x_big = jax.random.normal(kx2, (1000, state_size), jnp.float32)
    mean_b, std_b = worker_network_forward(x_big, prep, block_b=256)
    jax.block_until_ready((mean_b, std_b))
    mean_ref_b, std_ref_b = reference_forward(x_big, raw_params)
    assert mean_b.shape == (1000, action_size)
    assert jnp.allclose(mean_b, mean_ref_b, atol=1e-4, rtol=1e-4)
    assert jnp.allclose(std_b, std_ref_b, atol=1e-4, rtol=1e-4)
    assert bool(jnp.all(std_b > 0.0))

    print("KERNEL_OK")
</pallas_src>

<mosaic_0001>
module attributes {stable_mosaic.version = 11 : i64} {
  func.func @worker_network_kernel(%arg0: i32, %arg1: memref<4x8xf32, #tpu.memory_space<vmem>>, %arg2: memref<8x128xf32, #tpu.memory_space<vmem>>, %arg3: memref<1x128xf32, #tpu.memory_space<vmem>>, %arg4: memref<128x128xf32, #tpu.memory_space<vmem>>, %arg5: memref<1x128xf32, #tpu.memory_space<vmem>>, %arg6: memref<8x128xf32, #tpu.memory_space<vmem>>, %arg7: memref<8x1xf32, #tpu.memory_space<vmem>>, %arg8: memref<8x4xf32, #tpu.memory_space<vmem>>) attributes {dimension_semantics = [#tpu.dimension_semantics<parallel>], iteration_bounds = array<i64: 1>, scalar_prefetch = 0 : i64, scratch_operands = 0 : i64, tpu.core_type = #tpu.core_type<tc>, window_params = [{transform_indices = @transform_0, window_bounds = array<i64: 4, 8>}, {pipeline_mode = #tpu.pipeline_mode<synchronous>, transform_indices = @transform_1, window_bounds = array<i64: 8, 128>}, {pipeline_mode = #tpu.pipeline_mode<synchronous>, transform_indices = @transform_2, window_bounds = array<i64: 1, 128>}, {pipeline_mode = #tpu.pipeline_mode<synchronous>, transform_indices = @transform_3, window_bounds = array<i64: 128, 128>}, {pipeline_mode = #tpu.pipeline_mode<synchronous>, transform_indices = @transform_4, window_bounds = array<i64: 1, 128>}, {pipeline_mode = #tpu.pipeline_mode<synchronous>, transform_indices = @transform_5, window_bounds = array<i64: 8, 128>}, {pipeline_mode = #tpu.pipeline_mode<synchronous>, transform_indices = @transform_6, window_bounds = array<i64: 8, 1>}, {transform_indices = @transform_7, window_bounds = array<i64: 8, 4>}]} {
    %c0 = arith.constant 0 : index
    %c0_0 = arith.constant 0 : index
    %0 = vector.load %arg1[%c0, %c0_0] : memref<4x8xf32, #tpu.memory_space<vmem>>, vector<4x8xf32>
    %c0_1 = arith.constant 0 : index
    %c0_2 = arith.constant 0 : index
    %1 = vector.load %arg2[%c0_1, %c0_2] : memref<8x128xf32, #tpu.memory_space<vmem>>, vector<8x128xf32>
    %cst = arith.constant dense<0.000000e+00> : vector<4x128xf32>
    %2 = tpu.matmul %0, %1, %cst {dimension_numbers = #tpu.dot_dimension_numbers<[1], [0], [0], [1], [0, 0, 1, 1], [], []>} : vector<4x8xf32>, vector<8x128xf32>, vector<4x128xf32> -> vector<4x128xf32>
    %c0_3 = arith.constant 0 : index
    %c0_4 = arith.constant 0 : index
    %3 = vector.load %arg3[%c0_3, %c0_4] : memref<1x128xf32, #tpu.memory_space<vmem>>, vector<1x128xf32>
    %4 = vector.broadcast %3 : vector<1x128xf32> to vector<4x128xf32>
    %5 = arith.addf %2, %4 : vector<4x128xf32>
    %cst_5 = arith.constant 0.000000e+00 : f32
    %6 = vector.broadcast %cst_5 : f32 to vector<4x128xf32>
    %7 = arith.maximumf %5, %6 : vector<4x128xf32>
    %c0_6 = arith.constant 0 : index
    %c0_7 = arith.constant 0 : index
    %8 = vector.load %arg4[%c0_6, %c0_7] : memref<128x128xf32, #tpu.memory_space<vmem>>, vector<128x128xf32>
    %cst_8 = arith.constant dense<0.000000e+00> : vector<4x128xf32>
    %9 = tpu.matmul %7, %8, %cst_8 {dimension_numbers = #tpu.dot_dimension_numbers<[1], [0], [0], [1], [0, 0, 1, 1], [], []>} : vector<4x128xf32>, vector<128x128xf32>, vector<4x128xf32> -> vector<4x128xf32>
    %c0_9 = arith.constant 0 : index
    %c0_10 = arith.constant 0 : index
    %10 = vector.load %arg5[%c0_9, %c0_10] : memref<1x128xf32, #tpu.memory_space<vmem>>, vector<1x128xf32>
    %11 = vector.broadcast %10 : vector<1x128xf32> to vector<4x128xf32>
    %12 = arith.addf %9, %11 : vector<4x128xf32>
    %cst_11 = arith.constant 0.000000e+00 : f32
    %13 = vector.broadcast %cst_11 : f32 to vector<4x128xf32>
    %14 = arith.maximumf %12, %13 : vector<4x128xf32>
    %c0_12 = arith.constant 0 : index
    %c0_13 = arith.constant 0 : index
    %15 = vector.load %arg6[%c0_12, %c0_13] : memref<8x128xf32, #tpu.memory_space<vmem>>, vector<8x128xf32>
    %cst_14 = arith.constant dense<0.000000e+00> : vector<8x4xf32>
    %16 = tpu.matmul %15, %14, %cst_14 {dimension_numbers = #tpu.dot_dimension_numbers<[1], [1], [0], [0], [0, 0, 1, 0], [], []>} : vector<8x128xf32>, vector<4x128xf32>, vector<8x4xf32> -> vector<8x4xf32>
    %c0_15 = arith.constant 0 : index
    %c0_16 = arith.constant 0 : index
    %17 = vector.load %arg7[%c0_15, %c0_16] : memref<8x1xf32, #tpu.memory_space<vmem>>, vector<8x1xf32>
    %18 = vector.broadcast %17 : vector<8x1xf32> to vector<8x4xf32>
    %19 = arith.addf %16, %18 : vector<8x4xf32>
    %20 = math.absf %19 : vector<8x4xf32>
    %cst_17 = arith.constant 0.000000e+00 : f32
    %21 = vector.broadcast %cst_17 : f32 to vector<8x4xf32>
    %22 = arith.subf %21, %20 : vector<8x4xf32>
    %23 = math.exp %22 : vector<8x4xf32>
    %cst_18 = arith.constant 0.000000e+00 : f32
    %24 = vector.broadcast %cst_18 : f32 to vector<8x4xf32>
    %25 = arith.maximumf %19, %24 : vector<8x4xf32>
    %26 = math.log1p %23 : vector<8x4xf32>
    %27 = arith.addf %25, %26 : vector<8x4xf32>
    %cst_19 = arith.constant 9.99999974E-6 : f32
    %28 = vector.broadcast %cst_19 : f32 to vector<8x4xf32>
    %29 = arith.addf %27, %28 : vector<8x4xf32>
    %30 = tpu.iota {dimensions = array<i32: 0>} : vector<8x4xi32>
    %c2_i32 = arith.constant 2 : i32
    %31 = vector.broadcast %c2_i32 : i32 to vector<8x4xi32>
    %32 = arith.cmpi slt, %30, %31 : vector<8x4xi32>
    %33 = arith.select %32, %19, %29 : vector<8x4xi1>, vector<8x4xf32>
    %c0_20 = arith.constant 0 : index
    %c0_21 = arith.constant 0 : index
    %34 = vector.load %arg8[%c0_20, %c0_21] : memref<8x4xf32, #tpu.memory_space<vmem>>, vector<8x4xf32>
    tpu.vector_store %arg8[%c0_20, %c0_21], %33 {strides = array<i32>} : memref<8x4xf32, #tpu.memory_space<vmem>>, vector<8x4xf32>,
    return
  }
  func.func @transform_0(%arg0: i32) -> (i32, i32) {
    %c0_i32 = arith.constant 0 : i32
    %c0_i32_0 = arith.constant 0 : i32
    return %arg0, %c0_i32 : i32, i32
  }
  func.func @transform_1(%arg0: i32) -> (i32, i32) {
    %c0_i32 = arith.constant 0 : i32
    %c0_i32_0 = arith.constant 0 : i32
    %c0_i32_1 = arith.constant 0 : i32
    return %c0_i32, %c0_i32_0 : i32, i32
  }
  func.func @transform_2(%arg0: i32) -> (i32, i32) {
    %c0_i32 = arith.constant 0 : i32
    %c0_i32_0 = arith.constant 0 : i32
    %c0_i32_1 = arith.constant 0 : i32
    return %c0_i32, %c0_i32_0 : i32, i32
  }
  func.func @transform_3(%arg0: i32) -> (i32, i32) {
    %c0_i32 = arith.constant 0 : i32
    %c0_i32_0 = arith.constant 0 : i32
    %c0_i32_1 = arith.constant 0 : i32
    return %c0_i32, %c0_i32_0 : i32, i32
  }
  func.func @transform_4(%arg0: i32) -> (i32, i32) {
    %c0_i32 = arith.constant 0 : i32
    %c0_i32_0 = arith.constant 0 : i32
    %c0_i32_1 = arith.constant 0 : i32
    return %c0_i32, %c0_i32_0 : i32, i32
  }
  func.func @transform_5(%arg0: i32) -> (i32, i32) {
    %c0_i32 = arith.constant 0 : i32
    %c0_i32_0 = arith.constant 0 : i32
    %c0_i32_1 = arith.constant 0 : i32
    return %c0_i32, %c0_i32_0 : i32, i32
  }
  func.func @transform_6(%arg0: i32) -> (i32, i32) {
    %c0_i32 = arith.constant 0 : i32
    %c0_i32_0 = arith.constant 0 : i32
    %c0_i32_1 = arith.constant 0 : i32
    return %c0_i32, %c0_i32_0 : i32, i32
  }
  func.func @transform_7(%arg0: i32) -> (i32, i32) {
    %c0_i32 = arith.constant 0 : i32
    %c0_i32_0 = arith.constant 0 : i32
    return %c0_i32, %arg0 : i32, i32
  }
}

</mosaic_0001>

<llo_original>
// kernel: tpu_custom_call.1
$region0: #{tpu_custom_call.1}
  #allocation0 [shape = 'u32[]', space=smem, size = 0x4, offset = 0x4, fixed_abs, tag = 'smem constant byte address 0x4 - core index']
  #allocation1 [shape = 'u32[144,128]{1,0:T(1,128)}', space=vmem, size = 0x12000, scoped, tag = 'internal scratch']
  %s0 = inlined_call_operand.hbm [shape: f32[4,8], index: 0, kind: input, shape index: {}]
  %s1 = inlined_call_operand.vmem [shape: f32[8,128], index: 1, kind: input, shape index: {}]
  %s2 = inlined_call_operand.hbm [shape: f32[1,128], index: 2, kind: input, shape index: {}]
  %s3 = inlined_call_operand.hbm [shape: f32[128,128], index: 3, kind: input, shape index: {}]
  %s4 = inlined_call_operand.vmem [shape: f32[1,128], index: 4, kind: input, shape index: {}]
  %s5 = inlined_call_operand.vmem [shape: f32[8,128], index: 5, kind: input, shape index: {}]
  %s6 = inlined_call_operand.vmem [shape: f32[8,1], index: 6, kind: input, shape index: {}]
  %s7 = inlined_call_operand.vmem [shape: f32[8,4], index: 7, kind: output, shape index: {}]
  %s8 = sld [smem:[#allocation0]]
  $region50: #{tpu_custom_call.1} parent=0
    _
  %s10 = ssub.s32 1, %s8
  %s11 = scalar_select 0, %s10, %s8
  $region1: #{tpu_custom_call.1} parent=0
    #allocation2 [shape = 'u8[2048]{0}', space=vmem, size = 0x800, scoped, tag = 'input window, operand 0, single buffered']
    #allocation3 [shape = 's32[1]{0}', space=sflag, size = 0x4, scoped, tag = 'scoped memory for tpu_custom_call.1']
    #allocation4 [shape = 'u8[512]{0}', space=vmem, size = 0x400, scoped, tag = 'input window, operand 2, single buffered']
    #allocation5 [shape = 's32[1]{0}', space=sflag, size = 0x4, scoped, tag = 'scoped memory for tpu_custom_call.1']
    #allocation6 [shape = 'u8[65536]{0}', space=vmem, size = 0x10000, scoped, tag = 'input window, operand 3, single buffered']
    %12 = vsyncpa [#allocation3], 0
    %13 = vsyncpa [#allocation5], 0
    // Predicated region
    $region2: #{tpu_custom_call.1} parent=1 // pred_check
      _
    $region3: #{tpu_custom_call.1} parent=1 // pred_check_branch
      %15 = sbr.rel (0) target = $region5
    $region4: #{tpu_custom_call.1} parent=1 // pred_region
      %s17 = ssub.s32 64, 64
      %18 = vsyncadd [#allocation3], %s17
      %s20 = sshll.u32 [#allocation2], 4
      %s21 = int_to_ptr.vmem [resolvable:$true] %s20
      %23 = dma.hbm_to_vmem [thread:$0]  %s0, 64, %s21, [#allocation3]
    $region5: #{tpu_custom_call.1} parent=1 // pred_fallthru
      _
    // Predicated region
    $region6: #{tpu_custom_call.1} parent=1 // pred_check
      _
    $region7: #{tpu_custom_call.1} parent=1 // pred_check_branch
      %25 = sbr.rel (0) target = $region9
    $region8: #{tpu_custom_call.1} parent=1 // pred_region
      _
    $region9: #{tpu_custom_call.1} parent=1 // pred_fallthru
      _
    // Predicated region
    $region10: #{tpu_custom_call.1} parent=1 // pred_check
      _
    $region11: #{tpu_custom_call.1} parent=1 // pred_check_branch
      %27 = sbr.rel (0) target = $region13
    $region12: #{tpu_custom_call.1} parent=1 // pred_region
      %s29 = ssub.s32 16, 16
      %30 = vsyncadd [#allocation5], %s29
      %s32 = sshll.u32 [#allocation4], 4
      %s33 = int_to_ptr.vmem [resolvable:$true] %s32
      %35 = dma.hbm_to_vmem [thread:$0]  %s2, 16, %s33, [#allocation5]
    $region13: #{tpu_custom_call.1} parent=1 // pred_fallthru
      _
    // Predicated region
    $region14: #{tpu_custom_call.1} parent=1 // pred_check
      _
    $region15: #{tpu_custom_call.1} parent=1 // pred_check_branch
      %37 = sbr.rel (0) target = $region17
    $region16: #{tpu_custom_call.1} parent=1 // pred_region
      %s39 = ssub.s32 2048, 2048
      %40 = vsyncadd [#allocation5], %s39
      %s41 = sshll.u32 [#allocation6], 4
      %s42 = int_to_ptr.vmem [resolvable:$true] %s41
      %47 = dma.hbm_to_vmem [thread:$0]  %s3, 2048, %s42, [#allocation5], 128, 128, 8
    $region17: #{tpu_custom_call.1} parent=1 // pred_fallthru
      _
    // Predicated region
    $region18: #{tpu_custom_call.1} parent=1 // pred_check
      _
    $region19: #{tpu_custom_call.1} parent=1 // pred_check_branch
      %49 = sbr.rel (0) target = $region21
    $region20: #{tpu_custom_call.1} parent=1 // pred_region
      _
    $region21: #{tpu_custom_call.1} parent=1 // pred_fallthru
      _
    // Predicated region
    $region22: #{tpu_custom_call.1} parent=1 // pred_check
      _
    $region23: #{tpu_custom_call.1} parent=1 // pred_check_branch
      %51 = sbr.rel (0) target = $region25
    $region24: #{tpu_custom_call.1} parent=1 // pred_region
      _
    $region25: #{tpu_custom_call.1} parent=1 // pred_fallthru
      _
    // Predicated region
    $region26: #{tpu_custom_call.1} parent=1 // pred_check
      _
    $region27: #{tpu_custom_call.1} parent=1 // pred_check_branch
      %53 = sbr.rel (0) target = $region29
    $region28: #{tpu_custom_call.1} parent=1 // pred_region
      _
    $region29: #{tpu_custom_call.1} parent=1 // pred_fallthru
      _
    // Predicated region
    $region30: #{tpu_custom_call.1} parent=1 // pred_check
      _
    $region31: #{tpu_custom_call.1} parent=1 // pred_check_branch
      %55 = sbr.rel (0) target = $region33
    $region32: #{tpu_custom_call.1} parent=1 // pred_region
      %56 = dma.done [#allocation3], 64
    $region33: #{tpu_custom_call.1} parent=1 // pred_fallthru
      _
    // Predicated region
    $region34: #{tpu_custom_call.1} parent=1 // pred_check
      _
    $region35: #{tpu_custom_call.1} parent=1 // pred_check_branch
      %58 = sbr.rel (0) target = $region37
    $region36: #{tpu_custom_call.1} parent=1 // pred_region
      %59 = dma.done [#allocation5], 16
    $region37: #{tpu_custom_call.1} parent=1 // pred_fallthru
      _
    // Predicated region
    $region38: #{tpu_custom_call.1} parent=1 // pred_check
      _
    $region39: #{tpu_custom_call.1} parent=1 // pred_check_branch
      %61 = sbr.rel (0) target = $region41
    $region40: #{tpu_custom_call.1} parent=1 // pred_region
      %62 = dma.done [#allocation5], 2048
    $region41: #{tpu_custom_call.1} parent=1 // pred_fallthru
      _
    %v63 = vld [vmem:[#allocation2] sm:$0xf]
    %v64 = vld [vmem:[%s1] sm:$0xff]
    %v65 = vld [vmem:[#allocation4] sm:$0x1]
    %v67 = vlaneseq
    %v68 = vshrl.u32 %v67, 7
    %v69 = vsub.s32 0, %v68
    %v70 = vrot.slane %v65, %v69
    %vm72 = vcmask 64512
    %v74 = vsel %vm72, %v63, 0
    %76 = vmatprep.subr.mxu0 0.0
    %77 = vmatpush1.msra.mxu0 %v64
    %78 = vmatprep.subr.mxu0 0.0
    %79 = vmatpush1.msra.mxu0 0.0
    %80 = vmatprep.subr.mxu0 0.0
    %81 = vmatpush1.msra.mxu0 0.0
    %82 = vmatprep.subr.mxu0 0.0
    %83 = vmatpush1.msra.mxu0 0.0
    %84 = vmatprep.subr.mxu0 0.0
    %85 = vmatpush1.msra.mxu0 0.0
    %86 = vmatprep.subr.mxu0 0.0
    %87 = vmatpush1.msra.mxu0 0.0
    %88 = vmatprep.subr.mxu0 0.0
    %89 = vmatpush1.msra.mxu0 0.0
    %90 = vmatprep.subr.mxu0 0.0
    %91 = vmatpush1.msra.mxu0 0.0
    %92 = vmatprep.subr.mxu0 0.0
    %93 = vmatpush1.msra.mxu0 0.0
    %94 = vmatprep.subr.mxu0 0.0
    %95 = vmatpush1.msra.mxu0 0.0
    %96 = vmatprep.subr.mxu0 0.0
    %97 = vmatpush1.msra.mxu0 0.0
    %98 = vmatprep.subr.mxu0 0.0
    %99 = vmatpush1.msra.mxu0 0.0
    %100 = vmatprep.subr.mxu0 0.0
    %101 = vmatpush1.msra.mxu0 0.0
    %102 = vmatprep.subr.mxu0 0.0
    %103 = vmatpush1.msra.mxu0 0.0
    %104 = vmatprep.subr.mxu0 0.0
    %105 = vmatpush1.msra.mxu0 0.0
    %106 = vmatprep.subr.mxu0 0.0
    %107 = vmatpush1.msra.mxu0 0.0
    %108 = vmatprep.subr.mxu0 0.0
    %109 = vmatpush1.msra.mxu0 0.0
    %110 = vmatprep.subr.mxu0 0.0
    %111 = vmatpush1.msra.mxu0 0.0
    %112 = vmatprep.subr.mxu0 0.0
    %113 = vmatpush1.msra.mxu0 0.0
    %114 = vmatprep.subr.mxu0 0.0
    %115 = vmatpush1.msra.mxu0 0.0
    %116 = vmatprep.subr.mxu0 0.0
    %117 = vmatpush1.msra.mxu0 0.0
    %118 = vmatprep.subr.mxu0 0.0
    %119 = vmatpush1.msra.mxu0 0.0
    %120 = vmatprep.subr.mxu0 0.0
    %121 = vmatpush1.msra.mxu0 0.0
    %122 = vmatprep.subr.mxu0 0.0
    %123 = vmatpush1.msra.mxu0 0.0
    %124 = vmatprep.subr.mxu0 0.0
    %125 = vmatpush1.msra.mxu0 0.0
    %126 = vmatprep.subr.mxu0 0.0
    %127 = vmatpush1.msra.mxu0 0.0
    %128 = vmatprep.subr.mxu0 0.0
    %129 = vmatpush1.msra.mxu0 0.0
    %130 = vmatprep.subr.mxu0 0.0
    %131 = vmatpush1.msra.mxu0 0.0
    %132 = vmatprep.subr.mxu0 0.0
    %133 = vmatpush1.msra.mxu0 0.0
    %134 = vmatprep.subr.mxu0 0.0
    %135 = vmatpush1.msra.mxu0 0.0
    %136 = vmatprep.subr.mxu0 0.0
    %137 = vmatpush1.msra.mxu0 0.0
    %138 = vmatprep.subr.mxu0 0.0
    %139 = vmatpush1.msra.mxu0 0.0
    %140 = vmatprep.mubr.f32.mxu0 0.0
    %141 = vmatmul.mubr.f32.gmra.mrb[0].mxu0 %v74
    %v142 = vpop.f32.mrb[0].mxu0
    %v143 = vadd.f32 %v70, %v142
    %v144 = vpop.f32.mrb[0].mxu0
    %145 = vdwg.mxu0
    %v146 = vmax.f32 %v143, 0.0
    %v147 = vld [vmem:[#allocation6] sm:$0xff]
    %v148 = vld [vmem:[#allocation6 + $0x8] sm:$0xff]
    %v149 = vld [vmem:[#allocation6 + $0x10] sm:$0xff]
    %v150 = vld [vmem:[#allocation6 + $0x18] sm:$0xff]
    %v151 = vld [vmem:[#allocation6 + $0x20] sm:$0xff]
    %v152 = vld [vmem:[#allocation6 + $0x28] sm:$0xff]
    %v153 = vld [vmem:[#allocation6 + $0x30] sm:$0xff]
    %v154 = vld [vmem:[#allocation6 + $0x38] sm:$0xff]
    %v155 = vld [vmem:[#allocation6 + $0x40] sm:$0xff]
    %v156 = vld [vmem:[#allocation6 + $0x48] sm:$0xff]
    %v157 = vld [vmem:[#allocation6 + $0x50] sm:$0xff]
    %v158 = vld [vmem:[#allocation6 + $0x58] sm:$0xff]
    %v159 = vld [vmem:[#allocation6 + $0x60] sm:$0xff]
    %v160 = vld [vmem:[#allocation6 + $0x68] sm:$0xff]
    %v161 = vld [vmem:[#allocation6 + $0x70] sm:$0xff]
    %v162 = vld [vmem:[#allocation6 + $0x78] sm:$0xff]
    %v163 = vld [vmem:[%s4] sm:$0x1]
    %v165 = vlaneseq
    %v166 = vshrl.u32 %v165, 7
    %v167 = vsub.s32 0, %v166
    %v168 = vrot.slane %v163, %v167
    %170 = vmatprep.subr.mxu0 0.0
    %171 = vmatpush1.msra.mxu0 %v147
    %172 = vmatprep.subr.mxu0 0.0
    %173 = vmatpush1.msra.mxu0 %v148
    %174 = vmatprep.subr.mxu0 0.0
    %175 = vmatpush1.msra.mxu0 %v149
    %176 = vmatprep.subr.mxu0 0.0
    %177 = vmatpush1.msra.mxu0 %v150
    %178 = vmatprep.subr.mxu0 0.0
    %179 = vmatpush1.msra.mxu0 %v151
    %180 = vmatprep.subr.mxu0 0.0
    %181 = vmatpush1.msra.mxu0 %v152
    %182 = vmatprep.subr.mxu0 0.0
    %183 = vmatpush1.msra.mxu0 %v153
    %184 = vmatprep.subr.mxu0 0.0
    %185 = vmatpush1.msra.mxu0 %v154
    %186 = vmatprep.subr.mxu0 0.0
    %187 = vmatpush1.msra.mxu0 %v155
    %188 = vmatprep.subr.mxu0 0.0
    %189 = vmatpush1.msra.mxu0 %v156
    %190 = vmatprep.subr.mxu0 0.0
    %191 = vmatpush1.msra.mxu0 %v157
    %192 = vmatprep.subr.mxu0 0.0
    %193 = vmatpush1.msra.mxu0 %v158
    %194 = vmatprep.subr.mxu0 0.0
    %195 = vmatpush1.msra.mxu0 %v159
    %196 = vmatprep.subr.mxu0 0.0
    %197 = vmatpush1.msra.mxu0 %v160
    %198 = vmatprep.subr.mxu0 0.0
    %199 = vmatpush1.msra.mxu0 %v161
    %200 = vmatprep.subr.mxu0 0.0
    %201 = vmatpush1.msra.mxu0 %v162
    %202 = vmatprep.subr.mxu0 0.0
    %203 = vmatpush1.msra.mxu0 0.0
    %204 = vmatprep.subr.mxu0 0.0
    %205 = vmatpush1.msra.mxu0 0.0
    %206 = vmatprep.subr.mxu0 0.0
    %207 = vmatpush1.msra.mxu0 0.0
    %208 = vmatprep.subr.mxu0 0.0
    %209 = vmatpush1.msra.mxu0 0.0
    %210 = vmatprep.subr.mxu0 0.0
    %211 = vmatpush1.msra.mxu0 0.0
    %212 = vmatprep.subr.mxu0 0.0
    %213 = vmatpush1.msra.mxu0 0.0
    %214 = vmatprep.subr.mxu0 0.0
    %215 = vmatpush1.msra.mxu0 0.0
    %216 = vmatprep.subr.mxu0 0.0
    %217 = vmatpush1.msra.mxu0 0.0
    %218 = vmatprep.subr.mxu0 0.0
    %219 = vmatpush1.msra.mxu0 0.0
    %220 = vmatprep.subr.mxu0 0.0
    %221 = vmatpush1.msra.mxu0 0.0
    %222 = vmatprep.subr.mxu0 0.0
    %223 = vmatpush1.msra.mxu0 0.0
    %224 = vmatprep.subr.mxu0 0.0
    %225 = vmatpush1.msra.mxu0 0.0
    %226 = vmatprep.subr.mxu0 0.0
    %227 = vmatpush1.msra.mxu0 0.0
    %228 = vmatprep.subr.mxu0 0.0
    %229 = vmatpush1.msra.mxu0 0.0
    %230 = vmatprep.subr.mxu0 0.0
    %231 = vmatpush1.msra.mxu0 0.0
    %232 = vmatprep.subr.mxu0 0.0
    %233 = vmatpush1.msra.mxu0 0.0
    %234 = vmatprep.mubr.f32.mxu0 0.0
    %235 = vmatmul.mubr.f32.gmra.mrb[0].mxu0 %v146
    %v236 = vpop.f32.mrb[0].mxu0
    %v237 = vadd.f32 %v168, %v236
    %v238 = vpop.f32.mrb[0].mxu0
    %239 = vdwg.mxu0
    %v240 = vmax.f32 %v237, 0.0
    %v241 = vld [vmem:[%s5] sm:$0xff]
    %v242 = vld [vmem:[%s6] sm:$0xff]
    %244 = vset.pattern.permute.xlu0 0
    %245 = vperm.xlu0 %244, %v242
    %v246 = vpop.permute.xlu0 %245
    %248 = vmatprep.subr.mxu0 0.0
    %249 = vmatpush1.xpose.msra.mxu0 %v240
    %250 = vmatprep.subr.mxu0 0.0
    %251 = vmatpush1.xpose.msra.mxu0 0.0
    %252 = vmatprep.subr.mxu0 0.0
    %253 = vmatpush1.xpose.msra.mxu0 0.0
    %254 = vmatprep.subr.mxu0 0.0
    %255 = vmatpush1.xpose.msra.mxu0 0.0
    %256 = vmatprep.subr.mxu0 0.0
    %257 = vmatpush1.xpose.msra.mxu0 0.0
    %258 = vmatprep.subr.mxu0 0.0
    %259 = vmatpush1.xpose.msra.mxu0 0.0
    %260 = vmatprep.subr.mxu0 0.0
    %261 = vmatpush1.xpose.msra.mxu0 0.0
    %262 = vmatprep.subr.mxu0 0.0
    %263 = vmatpush1.xpose.msra.mxu0 0.0
    %264 = vmatprep.subr.mxu0 0.0
    %265 = vmatpush1.xpose.msra.mxu0 0.0
    %266 = vmatprep.subr.mxu0 0.0
    %267 = vmatpush1.xpose.msra.mxu0 0.0
    %268 = vmatprep.subr.mxu0 0.0
    %269 = vmatpush1.xpose.msra.mxu0 0.0
    %270 = vmatprep.subr.mxu0 0.0
    %271 = vmatpush1.xpose.msra.mxu0 0.0
    %272 = vmatprep.subr.mxu0 0.0
    %273 = vmatpush1.xpose.msra.mxu0 0.0
    %274 = vmatprep.subr.mxu0 0.0
    %275 = vmatpush1.xpose.msra.mxu0 0.0
    %276 = vmatprep.subr.mxu0 0.0
    %277 = vmatpush1.xpose.msra.mxu0 0.0
    %278 = vmatprep.subr.mxu0 0.0
    %279 = vmatpush1.xpose.msra.mxu0 0.0
    %280 = vmatprep.subr.mxu0 0.0
    %281 = vmatpush1.xpose.msra.mxu0 0.0
    %282 = vmatprep.subr.mxu0 0.0
    %283 = vmatpush1.xpose.msra.mxu0 0.0
    %284 = vmatprep.subr.mxu0 0.0
    %285 = vmatpush1.xpose.msra.mxu0 0.0
    %286 = vmatprep.subr.mxu0 0.0
    %287 = vmatpush1.xpose.msra.mxu0 0.0
    %288 = vmatprep.subr.mxu0 0.0
    %289 = vmatpush1.xpose.msra.mxu0 0.0
    %290 = vmatprep.subr.mxu0 0.0
    %291 = vmatpush1.xpose.msra.mxu0 0.0
    %292 = vmatprep.subr.mxu0 0.0
    %293 = vmatpush1.xpose.msra.mxu0 0.0
    %294 = vmatprep.subr.mxu0 0.0
    %295 = vmatpush1.xpose.msra.mxu0 0.0
    %296 = vmatprep.subr.mxu0 0.0
    %297 = vmatpush1.xpose.msra.mxu0 0.0
    %298 = vmatprep.subr.mxu0 0.0
    %299 = vmatpush1.xpose.msra.mxu0 0.0
    %300 = vmatprep.subr.mxu0 0.0
    %301 = vmatpush1.xpose.msra.mxu0 0.0
    %302 = vmatprep.subr.mxu0 0.0
    %303 = vmatpush1.xpose.msra.mxu0 0.0
    %304 = vmatprep.subr.mxu0 0.0
    %305 = vmatpush1.xpose.msra.mxu0 0.0
    %306 = vmatprep.subr.mxu0 0.0
    %307 = vmatpush1.xpose.msra.mxu0 0.0
    %308 = vmatprep.subr.mxu0 0.0
    %309 = vmatpush1.xpose.msra.mxu0 0.0
    %310 = vmatprep.subr.mxu0 0.0
    %311 = vmatpush1.xpose.msra.mxu0 0.0
    %312 = vmatprep.mubr.f32.mxu0 0.0
    %313 = vmatmul.mubr.f32.gmra.mrb[0].mxu0 %v241
    %v314 = vpop.f32.mrb[0].mxu0
    %v315 = vadd.f32 %v246, %v314
    %v316 = vpop.f32.mrb[0].mxu0
    %317 = vdwg.mxu0
    %v318 = vand.u32 2147483647, %v315
    %v319 = vsub.f32 0.0, %v318
    %v320 = vmul.f32 %v319, 1.442695
    %v321 = vpow.pop %v320
    %v322 = vmax.f32 %v315, 0.0
    %v323 = vadd.f32 %v321, 1.0
    %v324 = vlog2.pop %v323
    %v325 = vmul.f32 %v324, 0.6931472
    %v326 = vmul.f32 -0.5, %v321
    %v327 = vadd.f32 %v326, 1.0
    %v328 = vmul.f32 %v327, %v321
    %v329 = vand.u32 2147483647, %v321
    %vm330 = vcmp.lt.f32.partialorder %v329, 0.0004427343
    %v331 = vsel %vm330, %v328, %v325
    %v332 = vadd.f32 %v322, %v331
    %v333 = vadd.f32 %v332, 1e-05
    %v334 = vlaneseq
    %v335 = vshrl.u32 %v334, 7
    %vm336 = vcmp.lt.s32.totalorder %v335, 2
    %v337 = vsel %vm336, %v315, %v333
    %vm338 = vcmask 31744
    %339 = vst.msk [vmem:[%s7] sm:$0xff] %vm338, %v337
    // Predicated region
    $region42: #{tpu_custom_call.1} parent=1 // pred_check
      _
    $region43: #{tpu_custom_call.1} parent=1 // pred_check_branch
      %341 = sbr.rel (0) target = $region45
    $region44: #{tpu_custom_call.1} parent=1 // pred_region
      _
    $region45: #{tpu_custom_call.1} parent=1 // pred_fallthru
      _
    // Predicated region
    $region46: #{tpu_custom_call.1} parent=1 // pred_check
      _
    $region47: #{tpu_custom_call.1} parent=1 // pred_check_branch
      %343 = sbr.rel (0) target = $region49
    $region48: #{tpu_custom_call.1} parent=1 // pred_region
      _
    $region49: #{tpu_custom_call.1} parent=1 // pred_fallthru
      _
    %344 = vsyncpa [#allocation3], 1
    %345 = vsyncpa [#allocation5], 1

</llo_original>
